<compile_context>
chip_gen: v5e
topology: v5e:2x2
jax: 0.10.0
libtpu: 0.0.40
codegen_flags: <defaults>
</compile_context>

<pallas_src>
import functools

import jax
import jax.numpy as jnp
from jax.experimental import pallas as pl
from jax.experimental.pallas import tpu as pltpu


def _round_up(a: int, m: int) -> int:
    return ((a + m - 1) // m) * m


def _cdiv(a: int, b: int) -> int:
    return (a + b - 1) // b


def _vmem_cap_bytes() -> int:
    """Per-core VMEM capacity with headroom (v7x is the smallest at 64 MiB)."""
    phys = 64 * 1024 * 1024
    try:
        info = pltpu.get_tpu_info()
        phys = int(getattr(info, "vmem_capacity_bytes", phys))
    except Exception:
        pass
    return (phys * 7) // 8


# ---------------------------------------------------------------------------
# Kernels
# ---------------------------------------------------------------------------

def _resident_kernel(x_ref, w_ref, b_ref, o_ref, *, mm_dtype):
    """out = x @ W + b + x with the whole (Hp, Hp) weight resident in VMEM.

    x_ref: (tm, Hp) activations, original dtype (cast to mm_dtype in-kernel);
           the same tile also provides the residual.
    w_ref: (Hp, Hp) weight, already mm_dtype, single-buffered (constant block).
    b_ref: (1, Hp)  bias, f32.
    o_ref: (tm, Hp) output.
    """
    x = x_ref[...]
    y = jnp.dot(x.astype(mm_dtype), w_ref[...],
                preferred_element_type=jnp.float32)
    y = y + b_ref[...] + x.astype(jnp.float32)
    o_ref[...] = y.astype(o_ref.dtype)


def _tiled_kernel(x_ref, w_ref, b_ref, xres_ref, o_ref, acc_ref, *, mm_dtype):
    """(M, N, K)-tiled fallback for weights too large to keep resident."""
    k = pl.program_id(2)

    @pl.when(k == 0)
    def _init():
        # Fold bias + residual into the accumulator init so the last-k
        # epilogue is a pure cast/store.
        acc_ref[...] = b_ref[...] + xres_ref[...].astype(jnp.float32)

    acc_ref[...] += jnp.dot(x_ref[...].astype(mm_dtype), w_ref[...],
                            preferred_element_type=jnp.float32)

    @pl.when(k == pl.num_programs(2) - 1)
    def _finalize():
        o_ref[...] = acc_ref[...].astype(o_ref.dtype)


# ---------------------------------------------------------------------------
# Wrapper
# ---------------------------------------------------------------------------

def residual_linear(x, w, b, *, tm=None, tn=None, tk=None,
                    mxu_bf16=None, w_resident=None, vmem_limit_bytes=None):
    """Fused Residual(Linear): out = x @ w + b + x.

    x: [B, S, H]   w: [H, H]   b: [H]
    """
    B, S, H = x.shape
    M = B * S
    out_dtype = x.dtype

    # MXU input dtype: bf16 inputs + f32 accumulation is the fast path on all
    # generations (v7x MXU is bf16/fp8-only).  mxu_bf16=False gives a
    # bit-accurate f32 matmul.
    if mxu_bf16 is None:
        mxu_bf16 = True
    mm_dtype = jnp.bfloat16 if mxu_bf16 else x.dtype
    mm_bytes = jnp.dtype(mm_dtype).itemsize
    x_bytes = jnp.dtype(x.dtype).itemsize
    o_bytes = jnp.dtype(out_dtype).itemsize
    row_mult = 16 if mm_dtype == jnp.bfloat16 else 8

    # Lane-dense hidden dim (full-lane loads/stores, MXU-shaped tiles).
    Hp = _round_up(H, 128)

    vmem_cap = _vmem_cap_bytes()
    headroom = 4 << 20

    # ---- W-resident fast path decision --------------------------------------
    w_bytes_resident = Hp * Hp * mm_bytes
    if w_resident is None:
        w_resident = w_bytes_resident <= (20 << 20)
    use_resident = bool(w_resident)

    # ---- N/K tiles (tiled fallback only) -------------------------------------
    if not use_resident:
        if tn is None:
            tn = max(t for t in (512, 256, 128) if Hp % t == 0)
        if tk is None:
            tk = max(t for t in (512, 256, 128) if Hp % t == 0)
        assert Hp % tn == 0 and Hp % tk == 0

    # ---- row tile: minimize zero-row padding ---------------------------------
    if tm is None:
        target = 1024 if (not use_resident and mm_dtype == jnp.bfloat16) else 512
        tm = _round_up(_cdiv(M, _cdiv(M, target)), row_mult)
    else:
        tm = _round_up(tm, row_mult)

    def footprint(tm_):
        if use_resident:
            return (w_bytes_resident                      # W, single-buffered
                    + 2 * (tm_ * Hp * x_bytes             # x (LHS + residual)
                           + Hp * 4                        # bias (f32)
                           + tm_ * Hp * o_bytes))          # output tile
        return (2 * (tm_ * tk * x_bytes                    # x LHS tile
                     + tk * tn * mm_bytes                  # W tile
                     + tn * 4                              # bias tile
                     + tm_ * tn * x_bytes                  # residual tile
                     + tm_ * tn * o_bytes)                 # output tile
                + tm_ * tn * 4)                            # f32 accumulator

    # Shrink tm if the footprint would exceed the per-core VMEM cap.
    while footprint(tm) + headroom > vmem_cap and tm > row_mult:
        tm = _round_up(_cdiv(tm, 2), row_mult)

    # v7x shards the "parallel" grid axes over its 2 TensorCores; keep >= 2
    # parallel tiles when the token count allows it.
    n_col_tiles = 1 if use_resident else (Hp // tn)
    if (_round_up(M, tm) // tm) * n_col_tiles < 2 and M > row_mult:
        tm = _round_up(_cdiv(tm, 2), row_mult)

    Mp = _round_up(M, tm)

    if vmem_limit_bytes is None:
        vmem_limit_bytes = int(min(max(footprint(tm) + headroom, 32 << 20),
                                   vmem_cap))

    # ---- pad / cast inputs (zero padding keeps the math exact) ---------------
    # NOTE: in a real module, w_mm / b2 are static parameters — pad + cast them
    # once at init rather than per forward call.
    x2 = x.reshape(M, H)
    if (Mp, Hp) != (M, H):
        x2 = jnp.pad(x2, ((0, Mp - M), (0, Hp - H)))
    w_mm = w.astype(mm_dtype)
    if Hp != H:
        w_mm = jnp.pad(w_mm, ((0, Hp - H), (0, Hp - H)))
    b2 = b.astype(jnp.float32).reshape(1, H)
    if Hp != H:
        b2 = jnp.pad(b2, ((0, 0), (0, Hp - H)))

    # ---- pallas_call ----------------------------------------------------------
    if use_resident:
        kernel = functools.partial(_resident_kernel, mm_dtype=mm_dtype)
        out = pl.pallas_call(
            kernel,
            out_shape=jax.ShapeDtypeStruct((Mp, Hp), out_dtype),
            grid_spec=pltpu.PrefetchScalarGridSpec(
                num_scalar_prefetch=0,
                grid=(Mp // tm,),
                in_specs=[
                    # x tile: serves both the matmul LHS and the residual add.
                    pl.BlockSpec((tm, Hp), lambda i: (i, 0)),
                    # Whole weight, constant block index, single-buffered.
                    pl.BlockSpec((Hp, Hp), lambda i: (0, 0),
                                 pipeline_mode=pl.Buffered(1)),
                    pl.BlockSpec((1, Hp), lambda i: (0, 0)),      # bias (f32)
                ],
                out_specs=pl.BlockSpec((tm, Hp), lambda i: (i, 0)),
            ),
            compiler_params=pltpu.CompilerParams(
                dimension_semantics=("parallel",),
                vmem_limit_bytes=vmem_limit_bytes,
            ),
        )(x2, w_mm, b2)
    else:
        kernel = functools.partial(_tiled_kernel, mm_dtype=mm_dtype)
        out = pl.pallas_call(
            kernel,
            out_shape=jax.ShapeDtypeStruct((Mp, Hp), out_dtype),
            grid_spec=pltpu.PrefetchScalarGridSpec(
                num_scalar_prefetch=0,
                grid=(Mp // tm, Hp // tn, Hp // tk),   # reduction (K) last
                in_specs=[
                    pl.BlockSpec((tm, tk), lambda i, j, k: (i, k)),   # x (LHS)
                    pl.BlockSpec((tk, tn), lambda i, j, k: (k, j)),   # W tile
                    pl.BlockSpec((1, tn), lambda i, j, k: (0, j)),    # bias
                    pl.BlockSpec((tm, tn), lambda i, j, k: (i, j)),   # residual
                ],
                out_specs=pl.BlockSpec((tm, tn), lambda i, j, k: (i, j)),
                scratch_shapes=[pltpu.VMEM((tm, tn), jnp.float32)],
            ),
            compiler_params=pltpu.CompilerParams(
                dimension_semantics=("parallel", "parallel", "arbitrary"),
                vmem_limit_bytes=vmem_limit_bytes,
            ),
        )(x2, w_mm, b2, x2)

    if (Mp, Hp) != (M, H):
        out = out[:M, :H]
    return out.reshape(B, S, H)


class Residual:
    """JAX analogue of the PyTorch Residual wrapper: fn(x) + x."""

    def __init__(self, fn):
        self.fn = fn

    def __call__(self, x, **kwargs):
        return self.fn(x, **kwargs) + x


if __name__ == "__main__":
    # Small shapes consistent with the module: batch=2, seq=8, hidden=32.
    B, S, H = 2, 8, 32
    key = jax.random.PRNGKey(0)
    kx, kw, kb = jax.random.split(key, 3)

    x = jax.random.normal(kx, (B, S, H), dtype=jnp.float32)
    # Deterministic parameters for the inner fn (Linear(H, H)).
    w = jax.random.normal(kw, (H, H), dtype=jnp.float32) * 0.02
    b = jax.random.normal(kb, (H,), dtype=jnp.float32) * 0.02

    # Reference: generic Residual wrapper with fn in plain JAX (exact matmul).
    res_ref = Residual(
        lambda t: jnp.einsum("bsh,hk->bsk", t, w,
                             precision=jax.lax.Precision.HIGHEST) + b)
    ref = jax.block_until_ready(res_ref(x))

    # 1) Exact f32 MXU path, W-resident fast path.
    out_f32 = jax.block_until_ready(
        jax.jit(functools.partial(residual_linear, mxu_bf16=False))(x, w, b))
    assert out_f32.shape == x.shape and out_f32.dtype == x.dtype
    assert jnp.allclose(out_f32, ref, atol=2e-3, rtol=2e-3), "f32 resident mismatch"

    # 2) Default fast path: bf16 MXU inputs, f32 accumulation, W resident.
    out_bf16 = jax.block_until_ready(jax.jit(residual_linear)(x, w, b))
    assert out_bf16.shape == x.shape and out_bf16.dtype == x.dtype
    assert jnp.allclose(out_bf16, ref, atol=3e-2, rtol=3e-2), "bf16 resident mismatch"

    # 3) Forced (M, N, K)-tiled fallback (used when W is too big for VMEM).
    out_tiled = jax.block_until_ready(
        jax.jit(functools.partial(residual_linear, mxu_bf16=False,
                                  w_resident=False))(x, w, b))
    assert out_tiled.shape == x.shape and out_tiled.dtype == x.dtype
    assert jnp.allclose(out_tiled, ref, atol=2e-3, rtol=2e-3), "tiled mismatch"
    assert jnp.allclose(out_tiled, out_f32, atol=1e-5, rtol=1e-5), "path mismatch"

    print("KERNEL_OK")
</pallas_src>

<mosaic_0001>
module attributes {stable_mosaic.version = 11 : i64} {
  func.func @_resident_kernel(%arg0: i32, %arg1: memref<8x128xf32, #tpu.memory_space<vmem>>, %arg2: memref<128x128xf32, #tpu.memory_space<vmem>>, %arg3: memref<1x128xf32, #tpu.memory_space<vmem>>, %arg4: memref<8x128xf32, #tpu.memory_space<vmem>>) attributes {dimension_semantics = [#tpu.dimension_semantics<parallel>], iteration_bounds = array<i64: 2>, scalar_prefetch = 0 : i64, scratch_operands = 0 : i64, tpu.core_type = #tpu.core_type<tc>, window_params = [{transform_indices = @transform_0, window_bounds = array<i64: 8, 128>}, {pipeline_mode = #tpu.pipeline_mode<synchronous>, transform_indices = @transform_1, window_bounds = array<i64: 128, 128>}, {pipeline_mode = #tpu.pipeline_mode<synchronous>, transform_indices = @transform_2, window_bounds = array<i64: 1, 128>}, {transform_indices = @transform_3, window_bounds = array<i64: 8, 128>}]} {
    %c0 = arith.constant 0 : index
    %c0_0 = arith.constant 0 : index
    %0 = vector.load %arg1[%c0, %c0_0] : memref<8x128xf32, #tpu.memory_space<vmem>>, vector<8x128xf32>
    %c0_1 = arith.constant 0 : index
    %c0_2 = arith.constant 0 : index
    %1 = vector.load %arg2[%c0_1, %c0_2] : memref<128x128xf32, #tpu.memory_space<vmem>>, vector<128x128xf32>
    %cst = arith.constant dense<0.000000e+00> : vector<8x128xf32>
    %2 = tpu.matmul %0, %1, %cst {dimension_numbers = #tpu.dot_dimension_numbers<[1], [0], [0], [1], [0, 0, 1, 1], [], []>} : vector<8x128xf32>, vector<128x128xf32>, vector<8x128xf32> -> vector<8x128xf32>
    %c0_3 = arith.constant 0 : index
    %c0_4 = arith.constant 0 : index
    %3 = vector.load %arg3[%c0_3, %c0_4] : memref<1x128xf32, #tpu.memory_space<vmem>>, vector<1x128xf32>
    %4 = vector.broadcast %3 : vector<1x128xf32> to vector<8x128xf32>
    %5 = arith.addf %2, %4 : vector<8x128xf32>
    %6 = arith.addf %5, %0 : vector<8x128xf32>
    %c0_5 = arith.constant 0 : index
    %c0_6 = arith.constant 0 : index
    %7 = vector.load %arg4[%c0_5, %c0_6] : memref<8x128xf32, #tpu.memory_space<vmem>>, vector<8x128xf32>
    tpu.vector_store %arg4[%c0_5, %c0_6], %6 {strides = array<i32>} : memref<8x128xf32, #tpu.memory_space<vmem>>, vector<8x128xf32>,
    return
  }
  func.func @transform_0(%arg0: i32) -> (i32, i32) {
    %c0_i32 = arith.constant 0 : i32
    %c0_i32_0 = arith.constant 0 : i32
    return %arg0, %c0_i32 : i32, i32
  }
  func.func @transform_1(%arg0: i32) -> (i32, i32) {
    %c0_i32 = arith.constant 0 : i32
    %c0_i32_0 = arith.constant 0 : i32
    %c0_i32_1 = arith.constant 0 : i32
    return %c0_i32, %c0_i32_0 : i32, i32
  }
  func.func @transform_2(%arg0: i32) -> (i32, i32) {
    %c0_i32 = arith.constant 0 : i32
    %c0_i32_0 = arith.constant 0 : i32
    %c0_i32_1 = arith.constant 0 : i32
    return %c0_i32, %c0_i32_0 : i32, i32
  }
  func.func @transform_3(%arg0: i32) -> (i32, i32) {
    %c0_i32 = arith.constant 0 : i32
    %c0_i32_0 = arith.constant 0 : i32
    return %arg0, %c0_i32 : i32, i32
  }
}

</mosaic_0001>

<llo_original>
// kernel: residual_linear.1
$region0: #{residual_linear.1}
  #allocation0 [shape = 'u32[]', space=smem, size = 0x4, offset = 0x4, fixed_abs, tag = 'smem constant byte address 0x4 - core index']
  #allocation1 [shape = 'u32[72,128]{1,0:T(1,128)}', space=vmem, size = 0x9000, scoped, tag = 'internal scratch']
  %s0 = inlined_call_operand.vmem [shape: f32[16,128], index: 0, kind: input, shape index: {}]
  %s1 = inlined_call_operand.vmem [shape: f32[128,128], index: 1, kind: input, shape index: {}]
  %s2 = inlined_call_operand.vmem [shape: f32[1,128], index: 2, kind: input, shape index: {}]
  %s3 = inlined_call_operand.vmem [shape: f32[16,128], index: 3, kind: output, shape index: {}]
  %s4 = sld [smem:[#allocation0]]
  $region45: #{residual_linear.1} parent=0
    _
  %s6 = ssub.s32 1, %s4
  %s7 = scalar_select 0, %s6, %s4
  loop: start=0, step=1, limit=4
  $region2: #{residual_linear.1} parent=0 // loop_pre_header
    _
  $region3: #{residual_linear.1} parent=0 // loop_header
    %s9 = sphi 0, %s13
    %p10 = scmp.ge.s32.totalorder %s9, 4
    %s19 = sphi 0, %s21
    %s22 = sphi 0, %s19
    %s23 = sphi 0, %s22
    %s39 = sphi 0, %s23
    %s43 = sphi 0, %s43
    %s45 = sphi 0, %s43
    %s46 = sphi 0, %s45
    %s60 = sphi 0, %s46
    %s64 = sphi 0, %s64
    %s66 = sphi 0, %s64
    %s67 = sphi 0, %s66
    %s81 = sphi 0, %s67
    %s87 = sphi 0, %s89
    %s90 = sphi 0, %s87
    %s91 = sphi 0, %s90
    %s107 = sphi 0, %s91
  $region4: #{residual_linear.1} parent=0 // loop_header_branch
    %12 = sbr.rel (%p10) target = $region8
  $region5: #{residual_linear.1} parent=0 // loop_body
    %s14 = ssub.s32 %s9, 1
    %s15 = ssub.s32 %s9, 2
    %s16 = sadd.s32 %s9, 1
    %s17 = ssub.s32 %s9, %s16
    %p18 = scmp.eq.s32.totalorder %s17, 0
    %s20 = sadd.s32 %s19, 1
    %s21 = scalar_select %p18, %s19, %s20
    %p24 = pneg %p18
    %p25 = scmp.eq.s32.totalorder %s9, 1
    %p26 = por %p24, %p25
    %p27 = scmp.ne.s32.totalorder %s19, %s22
    %p28 = scmp.eq.s32.totalorder %s9, 0
    %p29 = por %p27, %p28
    %p30 = scmp.ne.s32.totalorder %s19, %s22
    %p31 = scmp.eq.s32.totalorder %s14, 1
    %p32 = por %p30, %p31
    %p33 = scmp.ne.s32.totalorder %s22, %s23
    %p34 = scmp.eq.s32.totalorder %s14, 0
    %p35 = por %p33, %p34
    %p36 = scmp.ne.s32.totalorder %s22, %s23
    %p37 = scmp.eq.s32.totalorder %s15, 1
    %p38 = por %p36, %p37
    %p40 = scmp.ne.s32.totalorder %s23, %s39
    %p41 = scmp.eq.s32.totalorder %s15, 0
    %p42 = por %p40, %p41
    %s44 = sadd.s32 %s43, 1
    %p47 = scmp.eq.s32.totalorder %s9, 1
    %p48 = scmp.ne.s32.totalorder %s43, %s45
    %p49 = scmp.eq.s32.totalorder %s9, 0
    %p50 = por %p48, %p49
    %p51 = scmp.ne.s32.totalorder %s43, %s45
    %p52 = scmp.eq.s32.totalorder %s14, 1
    %p53 = por %p51, %p52
    %p54 = scmp.ne.s32.totalorder %s45, %s46
    %p55 = scmp.eq.s32.totalorder %s14, 0
    %p56 = por %p54, %p55
    %p57 = scmp.ne.s32.totalorder %s45, %s46
    %p58 = scmp.eq.s32.totalorder %s15, 1
    %p59 = por %p57, %p58
    %p61 = scmp.ne.s32.totalorder %s46, %s60
    %p62 = scmp.eq.s32.totalorder %s15, 0
    %p63 = por %p61, %p62
    %s65 = sadd.s32 %s64, 1
    %p68 = scmp.eq.s32.totalorder %s9, 1
    %p69 = scmp.ne.s32.totalorder %s64, %s66
    %p70 = scmp.eq.s32.totalorder %s9, 0
    %p71 = por %p69, %p70
    %p72 = scmp.ne.s32.totalorder %s64, %s66
    %p73 = scmp.eq.s32.totalorder %s14, 1
    %p74 = por %p72, %p73
    %p75 = scmp.ne.s32.totalorder %s66, %s67
    %p76 = scmp.eq.s32.totalorder %s14, 0
    %p77 = por %p75, %p76
    %p78 = scmp.ne.s32.totalorder %s66, %s67
    %p79 = scmp.eq.s32.totalorder %s15, 1
    %p80 = por %p78, %p79
    %p82 = scmp.ne.s32.totalorder %s67, %s81
    %p83 = scmp.eq.s32.totalorder %s15, 0
    %p84 = por %p82, %p83
    %s85 = ssub.s32 %s9, %s16
    %p86 = scmp.eq.s32.totalorder %s85, 0
    %s88 = sadd.s32 %s87, 1
    %s89 = scalar_select %p86, %s87, %s88
    %p92 = pneg %p86
    %p93 = scmp.eq.s32.totalorder %s9, 1
    %p94 = por %p92, %p93
    %p95 = scmp.ne.s32.totalorder %s87, %s90
    %p96 = scmp.eq.s32.totalorder %s9, 0
    %p97 = por %p95, %p96
    %p98 = scmp.ne.s32.totalorder %s87, %s90
    %p99 = scmp.eq.s32.totalorder %s14, 1
    %p100 = por %p98, %p99
    %p101 = scmp.ne.s32.totalorder %s90, %s91
    %p102 = scmp.eq.s32.totalorder %s14, 0
    %p103 = por %p101, %p102
    %p104 = scmp.ne.s32.totalorder %s90, %s91
    %p105 = scmp.eq.s32.totalorder %s15, 1
    %p106 = por %p104, %p105
    %p108 = scmp.ne.s32.totalorder %s91, %s107
    %p109 = scmp.eq.s32.totalorder %s15, 0
    %p110 = por %p108, %p109
    %p111 = scmp.le.s32.totalorder 1, %s9
    %p112 = scmp.lt.s32.totalorder %s9, 3
    %p113 = pnand %p111, %p112
    %p114 = pneg %p113
    // Predicated region
    $region9: #{residual_linear.1} parent=5 // pred_check
      _
    $region10: #{residual_linear.1} parent=5 // pred_check_branch
      %116 = sbr.rel (%p113) target = $region12
    $region11: #{residual_linear.1} parent=5 // pred_region
      %s117 = ssub.s32 %s9, 1
      // Predicated region
      $region13: #{residual_linear.1} parent=11 // pred_check
        %p118 = pneg %p56
      $region14: #{residual_linear.1} parent=11 // pred_check_branch
        %120 = sbr.rel (%p118) target = $region16
      $region15: #{residual_linear.1} parent=11 // pred_region
        _
      $region16: #{residual_linear.1} parent=11 // pred_fallthru
        _
      // Predicated region
      $region17: #{residual_linear.1} parent=11 // pred_check
        %p121 = pneg %p77
      $region18: #{residual_linear.1} parent=11 // pred_check_branch
        %123 = sbr.rel (%p121) target = $region20
      $region19: #{residual_linear.1} parent=11 // pred_region
        _
      $region20: #{residual_linear.1} parent=11 // pred_fallthru
        _
    $region12: #{residual_linear.1} parent=5 // pred_fallthru
      _
    %p124 = scmp.lt.s32.totalorder %s9, 2
    // Predicated region
    $region21: #{residual_linear.1} parent=5 // pred_check
      %p125 = pneg %p124
    $region22: #{residual_linear.1} parent=5 // pred_check_branch
      %127 = sbr.rel (%p125) target = $region24
    $region23: #{residual_linear.1} parent=5 // pred_region
      // Predicated region
      $region25: #{residual_linear.1} parent=23 // pred_check
        %p128 = pneg %p29
      $region26: #{residual_linear.1} parent=23 // pred_check_branch
        %130 = sbr.rel (%p128) target = $region28
      $region27: #{residual_linear.1} parent=23 // pred_region
        %p131 = scmp.lt.s32.totalorder %s9, 1
        %s132 = scalar_select %p131, %s9, 1
        %s133 = smul.addr %s132, 8
        %s134 = scalar_lea.vmem %s0, %s133
      $region28: #{residual_linear.1} parent=23 // pred_fallthru
        _
    $region24: #{residual_linear.1} parent=5 // pred_fallthru
      _
    %p135 = scmp.le.s32.totalorder 1, %s9
    %p136 = scmp.lt.s32.totalorder %s9, 3
    %p137 = pnand %p135, %p136
    %p138 = pneg %p137
    // Predicated region
    $region29: #{residual_linear.1} parent=5 // pred_check
      _
    $region30: #{residual_linear.1} parent=5 // pred_check_branch
      %140 = sbr.rel (%p137) target = $region32
    $region31: #{residual_linear.1} parent=5 // pred_region
      %s141 = ssub.s32 %s9, 1
      %p142 = scmp.lt.s32.totalorder %s14, 1
      %s143 = scalar_select %p142, %s14, 1
      %s144 = smul.addr %s143, 8
      %s145 = scalar_lea.vmem %s0, %s144
      %p146 = pneg %p35
      %p147 = pneg %p32
      %p148 = pneg %p56
      %p149 = pneg %p53
      %p150 = pneg %p77
      %p151 = pneg %p74
      %p152 = pneg %p103
      %p153 = pneg %p100
      %p154 = scmp.lt.s32.totalorder %s14, 1
      %s155 = scalar_select %p154, %s14, 1
      %s156 = smul.addr %s155, 8
      %s157 = scalar_lea.vmem %s3, %s156
      %p158 = scmp.lt.s32.totalorder %s14, 1
      %s159 = scalar_select %p158, %s14, 1
      %s160 = smul.addr %s159, 8
      %s161 = scalar_lea.vmem %s0, %s160
      %p162 = scmp.lt.s32.totalorder %s14, 1
      %s163 = scalar_select %p162, %s14, 1
      %s164 = smul.addr %s163, 8
      %s165 = scalar_lea.vmem %s3, %s164
      %v166 = vld [vmem:[%s161] sm:$0xff]
      %v167 = vld [vmem:[%s1] sm:$0xff]
      %v168 = vld [vmem:[%s1 + $0x8] sm:$0xff]
      %v169 = vld [vmem:[%s1 + $0x10] sm:$0xff]
      %v170 = vld [vmem:[%s1 + $0x18] sm:$0xff]
      %v171 = vld [vmem:[%s1 + $0x20] sm:$0xff]
      %v172 = vld [vmem:[%s1 + $0x28] sm:$0xff]
      %v173 = vld [vmem:[%s1 + $0x30] sm:$0xff]
      %v174 = vld [vmem:[%s1 + $0x38] sm:$0xff]
      %v175 = vld [vmem:[%s1 + $0x40] sm:$0xff]
      %v176 = vld [vmem:[%s1 + $0x48] sm:$0xff]
      %v177 = vld [vmem:[%s1 + $0x50] sm:$0xff]
      %v178 = vld [vmem:[%s1 + $0x58] sm:$0xff]
      %v179 = vld [vmem:[%s1 + $0x60] sm:$0xff]
      %v180 = vld [vmem:[%s1 + $0x68] sm:$0xff]
      %v181 = vld [vmem:[%s1 + $0x70] sm:$0xff]
      %v182 = vld [vmem:[%s1 + $0x78] sm:$0xff]
      %v183 = vld [vmem:[%s2] sm:$0x1]
      %v185 = vperm.slane %v183, 0
      %187 = vmatpush.msra.mxu0 %v182
      %188 = vmatpush.msra.mxu0 %v181
      %189 = vmatpush.msra.mxu0 %v180
      %190 = vmatpush.msra.mxu0 %v179
      %191 = vmatpush.msra.mxu0 %v178
      %192 = vmatpush.msra.mxu0 %v177
      %193 = vmatpush.msra.mxu0 %v176
      %194 = vmatpush.msra.mxu0 %v175
      %195 = vmatpush.msra.mxu0 %v174
      %196 = vmatpush.msra.mxu0 %v173
      %197 = vmatpush.msra.mxu0 %v172
      %198 = vmatpush.msra.mxu0 %v171
      %199 = vmatpush.msra.mxu0 %v170
      %200 = vmatpush.msra.mxu0 %v169
      %201 = vmatpush.msra.mxu0 %v168
      %202 = vmatpush.msra.mxu0 %v167
      %203 = vmatmul.f32.gmra.mxu0 %v166
      %v204 = vpop.f32.mrf.mxu0
      %v205 = vadd.f32 %v185, %v204
      %206 = vdwg.mxu0
      %v207 = vadd.f32 %v205, %v166
      %208 = vst [vmem:[%s165] sm:$0xff] %v207
      %p209 = scmp.lt.s32.totalorder %s14, 1
      %s210 = scalar_select %p209, %s14, 1
      %s211 = smul.addr %s210, 8
      %s212 = scalar_lea.vmem %s3, %s211
      // Predicated region
      $region33: #{residual_linear.1} parent=31 // pred_check
        %p213 = pneg %p100
      $region34: #{residual_linear.1} parent=31 // pred_check_branch
        %215 = sbr.rel (%p213) target = $region36
      $region35: #{residual_linear.1} parent=31 // pred_region
        _
      $region36: #{residual_linear.1} parent=31 // pred_fallthru
        _
    $region32: #{residual_linear.1} parent=5 // pred_fallthru
      _
    %p216 = scmp.le.s32.totalorder 2, %s9
    // Predicated region
    $region37: #{residual_linear.1} parent=5 // pred_check
      %p217 = pneg %p216
    $region38: #{residual_linear.1} parent=5 // pred_check_branch
      %219 = sbr.rel (%p217) target = $region40
    $region39: #{residual_linear.1} parent=5 // pred_region
      %s220 = ssub.s32 %s9, 2
      // Predicated region
      $region41: #{residual_linear.1} parent=39 // pred_check
        %p221 = pneg %p106
      $region42: #{residual_linear.1} parent=39 // pred_check_branch
        %223 = sbr.rel (%p221) target = $region44
      $region43: #{residual_linear.1} parent=39 // pred_region
        %p224 = scmp.lt.s32.totalorder %s15, 1
        %s225 = scalar_select %p224, %s15, 1
        %s226 = smul.addr %s225, 8
        %s227 = scalar_lea.vmem %s3, %s226
      $region44: #{residual_linear.1} parent=39 // pred_fallthru
        _
    $region40: #{residual_linear.1} parent=5 // pred_fallthru
      _
  $region6: #{residual_linear.1} parent=0 // loop_footer
    %s13 = sadd.s32 1, %s9
  $region7: #{residual_linear.1} parent=0 // loop_footer_branch
    %8 = sbr.rel target = $region3
  $region8: #{residual_linear.1} parent=0 // loop_exit
    _

</llo_original>
